<compile_context>
chip_gen: v7x
topology: tpu7x:2x2x1
jax: 0.10.0
libtpu: 0.0.40
codegen_flags: <defaults>
</compile_context>

<pallas_src>
import jax
import jax.numpy as jnp
import numpy as np
from jax.experimental import pallas as pl
from jax.experimental.pallas import tpu as pltpu

BN_EPS = 1e-5  # nn.BatchNorm1d default eps

# bf16 is exact for small integer edge counts and halves the N^2 DMA.
ADJ_DTYPE = jnp.bfloat16
# Keep features f32 for bit-comparable numerics with the torch/f32 reference.
# (Set to jnp.bfloat16 on v6e/v7x for ~2x MXU rate at ~1e-2 relative error.)
FEATURE_DTYPE = jnp.float32

VMEM_LIMIT = 32 * 1024 * 1024  # safe on v5e (16 MiB default) .. v7x (64 MiB physical)


def _round_up(v, m):
    return (v + m - 1) // m * m


def _pad2(a, rows, cols):
    r, c = a.shape
    return jnp.pad(a, ((0, rows - r), (0, cols - c)))


# --------------------------------------------------------------------------- #
# Pass 1: y1 = ((1 + eps) * x + adj @ x) @ W1 + b1, grid = (row tiles, k tiles)
# --------------------------------------------------------------------------- #
def _agg_project_kernel(eps_ref, x_self_ref, adj_ref, x_k_ref, w1_ref, b1_ref,
                        y1_ref, acc_ref):
    k = pl.program_id(1)

    @pl.when(k == 0)
    def _():
        acc_ref[...] = (1.0 + eps_ref[0]) * x_self_ref[...].astype(jnp.float32)

    acc_ref[...] += jnp.dot(adj_ref[...].astype(jnp.float32),
                            x_k_ref[...].astype(jnp.float32),
                            preferred_element_type=jnp.float32)

    @pl.when(k == pl.num_programs(1) - 1)
    def _():
        y1_ref[...] = (jnp.dot(acc_ref[...], w1_ref[...],
                               preferred_element_type=jnp.float32)
                       + b1_ref[...]).astype(y1_ref.dtype)


# --------------------------------------------------------------------------- #
# Pass 2: y2 = relu(y1 * scale1 + shift1) @ W2 + b2, grid = (row tiles,)
# --------------------------------------------------------------------------- #
def _bn_relu_linear_kernel(y1_ref, s1_ref, t1_ref, w2_ref, b2_ref, y2_ref):
    r1 = jnp.maximum(y1_ref[...] * s1_ref[...] + t1_ref[...], 0.0)
    y2_ref[...] = (jnp.dot(r1, w2_ref[...], preferred_element_type=jnp.float32)
                   + b2_ref[...]).astype(y2_ref.dtype)


# --------------------------------------------------------------------------- #
# Pass 3: out = relu(y2 * scale2 + shift2), grid = (row tiles,)
# --------------------------------------------------------------------------- #
def _bn_relu_kernel(y2_ref, s2_ref, t2_ref, o_ref):
    o_ref[...] = jnp.maximum(y2_ref[...] * s2_ref[...] + t2_ref[...],
                             0.0).astype(o_ref.dtype)


def gin_conv_layer(x, edge_index, params, *, tile=256):
    """x: [N, C_in] float32, edge_index: [2, E] int32 (row 0 = src, row 1 = dst)."""
    n, in_c = x.shape
    out_c = params["w2"].shape[1]

    # Lane / sublane friendly padding.
    tile = min(tile, _round_up(max(n, 1), 128))
    n_pad = _round_up(n, tile)
    ci_pad = _round_up(in_c, 128)
    co_pad = _round_up(out_c, 128)
    mt = n_pad // tile
    kt = n_pad // tile

    # Glue: dense adjacency (edge scatter-add) built outside the kernel, but it
    # is consumed in (tile, tile) blocks so VMEM never holds the full N^2 matrix.
    # TODO(synk): for very large / sparse graphs switch to CSR offsets + scalar
    # prefetch (PrefetchScalarGridSpec) instead of a dense N^2 adjacency in HBM.
    src, dst = edge_index[0], edge_index[1]
    adj = (jnp.zeros((n_pad, n_pad), jnp.float32)
           .at[dst, src].add(1.0)
           .astype(ADJ_DTYPE))

    x_p = _pad2(x.astype(FEATURE_DTYPE), n_pad, ci_pad)
    w1 = _pad2(params["w1"], ci_pad, co_pad)
    b1 = _pad2(params["b1"], 1, co_pad)
    g1 = _pad2(params["g1"], 1, co_pad)
    be1 = _pad2(params["be1"], 1, co_pad)
    w2 = _pad2(params["w2"], co_pad, co_pad)
    b2 = _pad2(params["b2"], 1, co_pad)
    g2 = _pad2(params["g2"], 1, co_pad)
    be2 = _pad2(params["be2"], 1, co_pad)
    eps = params["eps"].reshape(1).astype(jnp.float32)

    adj_itemsize = jnp.dtype(ADJ_DTYPE).itemsize

    mk_params = pltpu.CompilerParams(
        dimension_semantics=("parallel", "arbitrary"),
        vmem_limit_bytes=VMEM_LIMIT)
    row_params = pltpu.CompilerParams(
        dimension_semantics=("parallel",),
        vmem_limit_bytes=VMEM_LIMIT)

    # ---- pass 1: aggregation + first Linear --------------------------------
    # TODO(synk): when out_channels < in_channels, project x through W1 first and
    # aggregate the projected features (h@W1 = (1+eps)(x@W1) + adj@(x@W1) + b1)
    # to shrink the dominant N^2*C matmul.
    y1 = pl.pallas_call(
        _agg_project_kernel,
        out_shape=jax.ShapeDtypeStruct((n_pad, co_pad), jnp.float32),
        grid=(mt, kt),
        in_specs=[
            pl.BlockSpec(memory_space=pltpu.MemorySpace.SMEM),    # eps (scalar)
            pl.BlockSpec((tile, ci_pad), lambda i, k: (i, 0)),    # x, self rows
            pl.BlockSpec((tile, tile), lambda i, k: (i, k)),      # adj tile
            pl.BlockSpec((tile, ci_pad), lambda i, k: (k, 0)),    # x, neighbor rows
            pl.BlockSpec((ci_pad, co_pad), lambda i, k: (0, 0)),  # W1
            pl.BlockSpec((1, co_pad), lambda i, k: (0, 0)),       # b1
        ],
        out_specs=pl.BlockSpec((tile, co_pad), lambda i, k: (i, 0)),
        scratch_shapes=[pltpu.VMEM((tile, ci_pad), jnp.float32)],
        compiler_params=mk_params,
        cost_estimate=pl.CostEstimate(
            flops=2 * n_pad * n_pad * ci_pad + 2 * n_pad * ci_pad * co_pad,
            transcendentals=0,
            bytes_accessed=(n_pad * n_pad * adj_itemsize
                            + 2 * n_pad * ci_pad * 4
                            + ci_pad * co_pad * 4
                            + n_pad * co_pad * 4)),
    )(eps, x_p, adj, x_p, w1, b1)

    # BatchNorm1 batch statistics (training-mode, biased variance) over the true
    # N rows only (padded rows must not pollute the stats). Tiny O(N*C) reduction.
    mean1 = jnp.mean(y1[:n], axis=0, keepdims=True)
    var1 = jnp.mean(jnp.square(y1[:n] - mean1), axis=0, keepdims=True)
    s1 = g1 * jax.lax.rsqrt(var1 + BN_EPS)
    t1 = be1 - mean1 * s1

    # ---- pass 2: BN1 + ReLU + second Linear ---------------------------------
    y2 = pl.pallas_call(
        _bn_relu_linear_kernel,
        out_shape=jax.ShapeDtypeStruct((n_pad, co_pad), jnp.float32),
        grid=(mt,),
        in_specs=[
            pl.BlockSpec((tile, co_pad), lambda i: (i, 0)),     # y1 tile
            pl.BlockSpec((1, co_pad), lambda i: (0, 0)),        # scale1
            pl.BlockSpec((1, co_pad), lambda i: (0, 0)),        # shift1
            pl.BlockSpec((co_pad, co_pad), lambda i: (0, 0)),   # W2
            pl.BlockSpec((1, co_pad), lambda i: (0, 0)),        # b2
        ],
        out_specs=pl.BlockSpec((tile, co_pad), lambda i: (i, 0)),
        compiler_params=row_params,
        cost_estimate=pl.CostEstimate(
            flops=2 * n_pad * co_pad * co_pad + 3 * n_pad * co_pad,
            transcendentals=0,
            bytes_accessed=2 * n_pad * co_pad * 4 + co_pad * co_pad * 4),
    )(y1, s1, t1, w2, b2)

    # BatchNorm2 batch statistics.
    mean2 = jnp.mean(y2[:n], axis=0, keepdims=True)
    var2 = jnp.mean(jnp.square(y2[:n] - mean2), axis=0, keepdims=True)
    s2 = g2 * jax.lax.rsqrt(var2 + BN_EPS)
    t2 = be2 - mean2 * s2

    # ---- pass 3: BN2 + ReLU --------------------------------------------------
    out = pl.pallas_call(
        _bn_relu_kernel,
        out_shape=jax.ShapeDtypeStruct((n_pad, co_pad), jnp.float32),
        grid=(mt,),
        in_specs=[
            pl.BlockSpec((tile, co_pad), lambda i: (i, 0)),
            pl.BlockSpec((1, co_pad), lambda i: (0, 0)),
            pl.BlockSpec((1, co_pad), lambda i: (0, 0)),
        ],
        out_specs=pl.BlockSpec((tile, co_pad), lambda i: (i, 0)),
        compiler_params=row_params,
        cost_estimate=pl.CostEstimate(
            flops=2 * n_pad * co_pad,
            transcendentals=0,
            bytes_accessed=2 * n_pad * co_pad * 4),
    )(y2, s2, t2)

    return out[:n, :out_c]


def reference(x, edge_index, params):
    n_nodes = x.shape[0]
    src, dst = edge_index[0], edge_index[1]
    adj = jnp.zeros((n_nodes, n_nodes), jnp.float32).at[dst, src].add(1.0)
    h = (1.0 + params["eps"][0, 0]) * x + adj @ x

    def block(z, w, b, g, be):
        y = z @ w + b
        mean = jnp.mean(y, axis=0, keepdims=True)
        var = jnp.mean(jnp.square(y - mean), axis=0, keepdims=True)
        return jnp.maximum(g * (y - mean) * jax.lax.rsqrt(var + BN_EPS) + be, 0.0)

    h1 = block(h, params["w1"], params["b1"], params["g1"], params["be1"])
    return block(h1, params["w2"], params["b2"], params["g2"], params["be2"])


def init_params(key, in_c, out_c):
    ks = jax.random.split(key, 4)
    bnd1 = 1.0 / np.sqrt(in_c)
    bnd2 = 1.0 / np.sqrt(out_c)
    return {
        # Linear weights stored as [in, out] (transpose of torch's [out, in]).
        "w1": jax.random.uniform(ks[0], (in_c, out_c), jnp.float32, -bnd1, bnd1),
        "b1": jax.random.uniform(ks[1], (1, out_c), jnp.float32, -bnd1, bnd1),
        "g1": jnp.ones((1, out_c), jnp.float32),
        "be1": jnp.zeros((1, out_c), jnp.float32),
        "w2": jax.random.uniform(ks[2], (out_c, out_c), jnp.float32, -bnd2, bnd2),
        "b2": jax.random.uniform(ks[3], (1, out_c), jnp.float32, -bnd2, bnd2),
        "g2": jnp.ones((1, out_c), jnp.float32),
        "be2": jnp.zeros((1, out_c), jnp.float32),
        # GINConv(train_eps=True) initializes eps to 0.0 (learnable scalar).
        "eps": jnp.zeros((1, 1), jnp.float32),
    }


if __name__ == "__main__":
    key = jax.random.PRNGKey(0)
    k_x, k_src, k_dst, k_p = jax.random.split(key, 4)

    num_nodes, num_edges = 16, 48
    in_channels, out_channels = 16, 32

    x = jax.random.normal(k_x, (num_nodes, in_channels), jnp.float32)
    edge_index = jnp.stack([
        jax.random.randint(k_src, (num_edges,), 0, num_nodes, dtype=jnp.int32),
        jax.random.randint(k_dst, (num_edges,), 0, num_nodes, dtype=jnp.int32),
    ])
    params = init_params(k_p, in_channels, out_channels)

    out = gin_conv_layer(x, edge_index, params)
    jax.block_until_ready(out)

    ref = reference(x, edge_index, params)
    np.testing.assert_allclose(np.asarray(out), np.asarray(ref), atol=1e-3, rtol=1e-3)

    print("KERNEL_OK")
</pallas_src>

<mosaic_0001>
module attributes {stable_mosaic.version = 11 : i64} {
  func.func @_agg_project_kernel(%arg0: i32, %arg1: i32, %arg2: memref<1xf32, #tpu.memory_space<smem>>, %arg3: memref<128x128xf32, #tpu.memory_space<vmem>>, %arg4: memref<128x128xbf16, #tpu.memory_space<vmem>>, %arg5: memref<128x128xf32, #tpu.memory_space<vmem>>, %arg6: memref<128x128xf32, #tpu.memory_space<vmem>>, %arg7: memref<1x128xf32, #tpu.memory_space<vmem>>, %arg8: memref<128x128xf32, #tpu.memory_space<vmem>>, %arg9: memref<128x128xf32, #tpu.memory_space<vmem>>) attributes {dimension_semantics = [#tpu.dimension_semantics<parallel>, #tpu.dimension_semantics<arbitrary>], iteration_bounds = array<i64: 1, 1>, scalar_prefetch = 0 : i64, scratch_operands = 1 : i64, tpu.core_type = #tpu.core_type<tc>, window_params = [{transform_indices = @transform_0, window_bounds = array<i64: 1>}, {transform_indices = @transform_1, window_bounds = array<i64: 128, 128>}, {transform_indices = @transform_2, window_bounds = array<i64: 128, 128>}, {transform_indices = @transform_3, window_bounds = array<i64: 128, 128>}, {pipeline_mode = #tpu.pipeline_mode<synchronous>, transform_indices = @transform_4, window_bounds = array<i64: 128, 128>}, {pipeline_mode = #tpu.pipeline_mode<synchronous>, transform_indices = @transform_5, window_bounds = array<i64: 1, 128>}, {transform_indices = @transform_6, window_bounds = array<i64: 128, 128>}]} {
    %c0_i32 = arith.constant 0 : i32
    %0 = arith.cmpi eq, %arg1, %c0_i32 : i32
    %1 = arith.extui %0 : i1 to i32
    %c0_i32_0 = arith.constant 0 : i32
    %2 = arith.cmpi ne, %1, %c0_i32_0 : i32
    scf.if %2 {
      %c0_10 = arith.constant 0 : index
      %13 = memref.load %arg2[%c0_10] : memref<1xf32, #tpu.memory_space<smem>>
      %cst_11 = arith.constant 1.000000e+00 : f32
      %14 = arith.addf %cst_11, %13 : f32
      %c0_12 = arith.constant 0 : index
      %c0_13 = arith.constant 0 : index
      %15 = vector.load %arg3[%c0_12, %c0_13] : memref<128x128xf32, #tpu.memory_space<vmem>>, vector<128x128xf32>
      %16 = vector.broadcast %14 : f32 to vector<128x128xf32>
      %17 = arith.mulf %16, %15 : vector<128x128xf32>
      %c0_14 = arith.constant 0 : index
      %c0_15 = arith.constant 0 : index
      %18 = vector.load %arg9[%c0_14, %c0_15] : memref<128x128xf32, #tpu.memory_space<vmem>>, vector<128x128xf32>
      tpu.vector_store %arg9[%c0_14, %c0_15], %17 {strides = array<i32>} : memref<128x128xf32, #tpu.memory_space<vmem>>, vector<128x128xf32>,
    } else {
    }
    %c0 = arith.constant 0 : index
    %c0_1 = arith.constant 0 : index
    %3 = vector.load %arg9[%c0, %c0_1] : memref<128x128xf32, #tpu.memory_space<vmem>>, vector<128x128xf32>
    %c0_2 = arith.constant 0 : index
    %c0_3 = arith.constant 0 : index
    %4 = vector.load %arg4[%c0_2, %c0_3] : memref<128x128xbf16, #tpu.memory_space<vmem>>, vector<128x128xbf16>
    %5 = arith.extf %4 : vector<128x128xbf16> to vector<128x128xf32>
    %c0_4 = arith.constant 0 : index
    %c0_5 = arith.constant 0 : index
    %6 = vector.load %arg5[%c0_4, %c0_5] : memref<128x128xf32, #tpu.memory_space<vmem>>, vector<128x128xf32>
    %cst = arith.constant dense<0.000000e+00> : vector<128x128xf32>
    %7 = tpu.matmul %5, %6, %cst {dimension_numbers = #tpu.dot_dimension_numbers<[1], [0], [0], [1], [0, 0, 1, 1], [], []>} : vector<128x128xf32>, vector<128x128xf32>, vector<128x128xf32> -> vector<128x128xf32>
    %8 = arith.addf %3, %7 : vector<128x128xf32>
    %c0_6 = arith.constant 0 : index
    %c0_7 = arith.constant 0 : index
    %9 = vector.load %arg9[%c0_6, %c0_7] : memref<128x128xf32, #tpu.memory_space<vmem>>, vector<128x128xf32>
    tpu.vector_store %arg9[%c0_6, %c0_7], %8 {strides = array<i32>} : memref<128x128xf32, #tpu.memory_space<vmem>>, vector<128x128xf32>,
    %c0_i32_8 = arith.constant 0 : i32
    %10 = arith.cmpi eq, %arg1, %c0_i32_8 : i32
    %11 = arith.extui %10 : i1 to i32
    %c0_i32_9 = arith.constant 0 : i32
    %12 = arith.cmpi ne, %11, %c0_i32_9 : i32
    scf.if %12 {
      %c0_10 = arith.constant 0 : index
      %c0_11 = arith.constant 0 : index
      %13 = vector.load %arg9[%c0_10, %c0_11] : memref<128x128xf32, #tpu.memory_space<vmem>>, vector<128x128xf32>
      %c0_12 = arith.constant 0 : index
      %c0_13 = arith.constant 0 : index
      %14 = vector.load %arg6[%c0_12, %c0_13] : memref<128x128xf32, #tpu.memory_space<vmem>>, vector<128x128xf32>
      %cst_14 = arith.constant dense<0.000000e+00> : vector<128x128xf32>
      %15 = tpu.matmul %13, %14, %cst_14 {dimension_numbers = #tpu.dot_dimension_numbers<[1], [0], [0], [1], [0, 0, 1, 1], [], []>} : vector<128x128xf32>, vector<128x128xf32>, vector<128x128xf32> -> vector<128x128xf32>
      %c0_15 = arith.constant 0 : index
      %c0_16 = arith.constant 0 : index
      %16 = vector.load %arg7[%c0_15, %c0_16] : memref<1x128xf32, #tpu.memory_space<vmem>>, vector<1x128xf32>
      %17 = vector.broadcast %16 : vector<1x128xf32> to vector<128x128xf32>
      %18 = arith.addf %15, %17 : vector<128x128xf32>
      %c0_17 = arith.constant 0 : index
      %c0_18 = arith.constant 0 : index
      %19 = vector.load %arg8[%c0_17, %c0_18] : memref<128x128xf32, #tpu.memory_space<vmem>>, vector<128x128xf32>
      tpu.vector_store %arg8[%c0_17, %c0_18], %18 {strides = array<i32>} : memref<128x128xf32, #tpu.memory_space<vmem>>, vector<128x128xf32>,
    } else {
    }
    return
  }
  func.func @transform_0(%arg0: i32, %arg1: i32) -> i32 {
    %c0_i32 = arith.constant 0 : i32
    %c0_i32_0 = arith.constant 0 : i32
    return %c0_i32 : i32
  }
  func.func @transform_1(%arg0: i32, %arg1: i32) -> (i32, i32) {
    %c0_i32 = arith.constant 0 : i32
    %c0_i32_0 = arith.constant 0 : i32
    return %arg0, %c0_i32 : i32, i32
  }
  func.func @transform_2(%arg0: i32, %arg1: i32) -> (i32, i32) {
    %c0_i32 = arith.constant 0 : i32
    return %arg0, %arg1 : i32, i32
  }
  func.func @transform_3(%arg0: i32, %arg1: i32) -> (i32, i32) {
    %c0_i32 = arith.constant 0 : i32
    %c0_i32_0 = arith.constant 0 : i32
    return %arg1, %c0_i32 : i32, i32
  }
  func.func @transform_4(%arg0: i32, %arg1: i32) -> (i32, i32) {
    %c0_i32 = arith.constant 0 : i32
    %c0_i32_0 = arith.constant 0 : i32
    %c0_i32_1 = arith.constant 0 : i32
    return %c0_i32, %c0_i32_0 : i32, i32
  }
  func.func @transform_5(%arg0: i32, %arg1: i32) -> (i32, i32) {
    %c0_i32 = arith.constant 0 : i32
    %c0_i32_0 = arith.constant 0 : i32
    %c0_i32_1 = arith.constant 0 : i32
    return %c0_i32, %c0_i32_0 : i32, i32
  }
  func.func @transform_6(%arg0: i32, %arg1: i32) -> (i32, i32) {
    %c0_i32 = arith.constant 0 : i32
    %c0_i32_0 = arith.constant 0 : i32
    return %arg0, %c0_i32 : i32, i32
  }
}

</mosaic_0001>

<llo_original>
// kernel: tpu_custom_call.1
$region0: #{tpu_custom_call.1}
  #allocation0 [shape = 'u32[]', space=smem, size = 0x4, offset = 0x4, fixed_abs, tag = 'smem constant byte address 0x4 - core index']
  #allocation1 [shape = 'u32[144,128]{1,0:T(1,128)}', space=vmem, size = 0x12000, scoped, tag = 'internal scratch']
  #allocation2 [shape = 'f32[128,128]{1,0:T(8,128)}', space=vmem, size = 0x10000, scoped, tag = 'scratch operand']
  #allocation3 [shape = 'f32[1]{0:T(128)S(6)}', space=smem, size = 0x200, scoped, tag = 'scoped memory for tpu_custom_call.1']
  %s0 = inlined_call_operand.<no memory space> [shape: f32[1], index: 0, kind: input, shape index: {}]
  %s1 = inlined_call_operand.hbm [shape: f32[128,128], index: 1, kind: input, shape index: {}]
  %s2 = inlined_call_operand.hbm [shape: bf16[128,128], index: 2, kind: input, shape index: {}]
  %s3 = inlined_call_operand.hbm [shape: f32[128,128], index: 3, kind: input, shape index: {}]
  %s4 = inlined_call_operand.hbm [shape: f32[128,128], index: 4, kind: input, shape index: {}]
  %s5 = inlined_call_operand.vmem [shape: f32[1,128], index: 5, kind: input, shape index: {}]
  %s6 = inlined_call_operand.hbm [shape: f32[128,128], index: 6, kind: output, shape index: {}]
  %s7 = sld [smem:[#allocation0]]
  $region58: #{tpu_custom_call.1} parent=0
    _
  %s9 = ssub.s32 1, %s7
  %s10 = scalar_select 0, %s9, %s7
  %11 = sst [smem:[#allocation3]] %s0
  $region1: #{tpu_custom_call.1} parent=0
    #allocation4 [shape = 'u8[65536]{0}', space=vmem, size = 0x10000, scoped, tag = 'input window, operand 1, single buffered']
    #allocation5 [shape = 's32[1]{0}', space=sflag, size = 0x4, scoped, tag = 'scoped memory for tpu_custom_call.1']
    #allocation6 [shape = 's32[1]{0}', space=sflag, size = 0x4, scoped, tag = 'scoped memory for tpu_custom_call.1']
    #allocation7 [shape = 'u8[32768]{0}', space=vmem, size = 0x8000, scoped, tag = 'input window, operand 2, single buffered']
    #allocation8 [shape = 's32[1]{0}', space=sflag, size = 0x4, scoped, tag = 'scoped memory for tpu_custom_call.1']
    #allocation9 [shape = 'u8[65536]{0}', space=vmem, size = 0x10000, scoped, tag = 'input window, operand 3, single buffered']
    #allocation10 [shape = 'u8[65536]{0}', space=vmem, size = 0x10000, scoped, tag = 'input window, operand 4, single buffered']
    #allocation11 [shape = 's32[1]{0}', space=sflag, size = 0x4, scoped, tag = 'scoped memory for tpu_custom_call.1']
    #allocation12 [shape = 'u8[65536]{0}', space=vmem, size = 0x10000, scoped, tag = 'output window, operand 0, single buffered']
    %12 = vsyncpa [#allocation5], 0
    %13 = vsyncpa [#allocation8], 0
    %14 = vsyncpa [#allocation11], 0
    %15 = vsyncpa [#allocation6], 0
    // Predicated region
    $region2: #{tpu_custom_call.1} parent=1 // pred_check
      _
    $region3: #{tpu_custom_call.1} parent=1 // pred_check_branch
      %17 = sbr.rel (0) target = $region5
    $region4: #{tpu_custom_call.1} parent=1 // pred_region
      _
    $region5: #{tpu_custom_call.1} parent=1 // pred_fallthru
      _
    // Predicated region
    $region6: #{tpu_custom_call.1} parent=1 // pred_check
      _
    $region7: #{tpu_custom_call.1} parent=1 // pred_check_branch
      %19 = sbr.rel (0) target = $region9
    $region8: #{tpu_custom_call.1} parent=1 // pred_region
      %s21 = ssub.s32 2048, 2048
      %22 = vsyncadd [#allocation5], %s21
      %s23 = sshll.u32 [#allocation4], 4
      %s24 = int_to_ptr.vmem [resolvable:$true] %s23
      %29 = dma.hbm_to_vmem [thread:$0]  %s1, 2048, %s24, [#allocation5], 128, 128, 8
    $region9: #{tpu_custom_call.1} parent=1 // pred_fallthru
      _
    // Predicated region
    $region10: #{tpu_custom_call.1} parent=1 // pred_check
      _
    $region11: #{tpu_custom_call.1} parent=1 // pred_check_branch
      %31 = sbr.rel (0) target = $region13
    $region12: #{tpu_custom_call.1} parent=1 // pred_region
      %s33 = ssub.s32 1024, 1024
      %34 = vsyncadd [#allocation8], %s33
      %s35 = sshll.u32 [#allocation7], 4
      %s36 = int_to_ptr.vmem [resolvable:$true] %s35
      %41 = dma.hbm_to_vmem [thread:$0]  %s2, 1024, %s36, [#allocation8], 64, 64, 4
    $region13: #{tpu_custom_call.1} parent=1 // pred_fallthru
      _
    // Predicated region
    $region14: #{tpu_custom_call.1} parent=1 // pred_check
      _
    $region15: #{tpu_custom_call.1} parent=1 // pred_check_branch
      %43 = sbr.rel (0) target = $region17
    $region16: #{tpu_custom_call.1} parent=1 // pred_region
      %s45 = ssub.s32 2048, 2048
      %46 = vsyncadd [#allocation8], %s45
      %s47 = sshll.u32 [#allocation9], 4
      %s48 = int_to_ptr.vmem [resolvable:$true] %s47
      %53 = dma.hbm_to_vmem [thread:$0]  %s3, 2048, %s48, [#allocation8], 128, 128, 8
    $region17: #{tpu_custom_call.1} parent=1 // pred_fallthru
      _
    // Predicated region
    $region18: #{tpu_custom_call.1} parent=1 // pred_check
      _
    $region19: #{tpu_custom_call.1} parent=1 // pred_check_branch
      %55 = sbr.rel (0) target = $region21
    $region20: #{tpu_custom_call.1} parent=1 // pred_region
      %s57 = ssub.s32 2048, 2048
      %58 = vsyncadd [#allocation11], %s57
      %s59 = sshll.u32 [#allocation10], 4
      %s60 = int_to_ptr.vmem [resolvable:$true] %s59
      %65 = dma.hbm_to_vmem [thread:$0]  %s4, 2048, %s60, [#allocation11], 128, 128, 8
    $region21: #{tpu_custom_call.1} parent=1 // pred_fallthru
      _
    // Predicated region
    $region22: #{tpu_custom_call.1} parent=1 // pred_check
      _
    $region23: #{tpu_custom_call.1} parent=1 // pred_check_branch
      %67 = sbr.rel (0) target = $region25
    $region24: #{tpu_custom_call.1} parent=1 // pred_region
      _
    $region25: #{tpu_custom_call.1} parent=1 // pred_fallthru
      _
    // Predicated region
    $region26: #{tpu_custom_call.1} parent=1 // pred_check
      _
    $region27: #{tpu_custom_call.1} parent=1 // pred_check_branch
      %69 = sbr.rel (0) target = $region29
    $region28: #{tpu_custom_call.1} parent=1 // pred_region
      %70 = dma.done [#allocation5], 2048
    $region29: #{tpu_custom_call.1} parent=1 // pred_fallthru
      _
    // Predicated region
    $region30: #{tpu_custom_call.1} parent=1 // pred_check
      _
    $region31: #{tpu_custom_call.1} parent=1 // pred_check_branch
      %72 = sbr.rel (0) target = $region33
    $region32: #{tpu_custom_call.1} parent=1 // pred_region
      %73 = dma.done [#allocation8], 1024
    $region33: #{tpu_custom_call.1} parent=1 // pred_fallthru
      _
    // Predicated region
    $region34: #{tpu_custom_call.1} parent=1 // pred_check
      _
    $region35: #{tpu_custom_call.1} parent=1 // pred_check_branch
      %75 = sbr.rel (0) target = $region37
    $region36: #{tpu_custom_call.1} parent=1 // pred_region
      %76 = dma.done [#allocation8], 2048
    $region37: #{tpu_custom_call.1} parent=1 // pred_fallthru
      _
    // Predicated region
    $region38: #{tpu_custom_call.1} parent=1 // pred_check
      _
    $region39: #{tpu_custom_call.1} parent=1 // pred_check_branch
      %78 = sbr.rel (0) target = $region41
    $region40: #{tpu_custom_call.1} parent=1 // pred_region
      %79 = dma.done [#allocation11], 2048
    $region41: #{tpu_custom_call.1} parent=1 // pred_fallthru
      _
    %p80 = scmp.eq.s32.totalorder 0, 0
    // Predicated region
    $region42: #{tpu_custom_call.1} parent=1 // pred_check
      %p81 = pneg %p80
    $region43: #{tpu_custom_call.1} parent=1 // pred_check_branch
      %83 = sbr.rel (%p81) target = $region45
    $region44: #{tpu_custom_call.1} parent=1 // pred_region
      %s84 = sld [smem:[#allocation3]]
      %s85 = sadd.f32 %s84, 1.0
      %v86 = vld [vmem:[#allocation4] sm:$0xff]
      %v87 = vld [vmem:[#allocation4 + $0x8] sm:$0xff]
      %v88 = vld [vmem:[#allocation4 + $0x10] sm:$0xff]
      %v89 = vld [vmem:[#allocation4 + $0x18] sm:$0xff]
      %v90 = vld [vmem:[#allocation4 + $0x20] sm:$0xff]
      %v91 = vld [vmem:[#allocation4 + $0x28] sm:$0xff]
      %v92 = vld [vmem:[#allocation4 + $0x30] sm:$0xff]
      %v93 = vld [vmem:[#allocation4 + $0x38] sm:$0xff]
      %v94 = vld [vmem:[#allocation4 + $0x40] sm:$0xff]
      %v95 = vld [vmem:[#allocation4 + $0x48] sm:$0xff]
      %v96 = vld [vmem:[#allocation4 + $0x50] sm:$0xff]
      %v97 = vld [vmem:[#allocation4 + $0x58] sm:$0xff]
      %v98 = vld [vmem:[#allocation4 + $0x60] sm:$0xff]
      %v99 = vld [vmem:[#allocation4 + $0x68] sm:$0xff]
      %v100 = vld [vmem:[#allocation4 + $0x70] sm:$0xff]
      %v101 = vld [vmem:[#allocation4 + $0x78] sm:$0xff]
      %v102 = vstv %s85
      %v103 = vmul.f32 %v102, %v86
      %v104 = vmul.f32 %v102, %v87
      %v105 = vmul.f32 %v102, %v88
      %v106 = vmul.f32 %v102, %v89
      %v107 = vmul.f32 %v102, %v90
      %v108 = vmul.f32 %v102, %v91
      %v109 = vmul.f32 %v102, %v92
      %v110 = vmul.f32 %v102, %v93
      %v111 = vmul.f32 %v102, %v94
      %v112 = vmul.f32 %v102, %v95
      %v113 = vmul.f32 %v102, %v96
      %v114 = vmul.f32 %v102, %v97
      %v115 = vmul.f32 %v102, %v98
      %v116 = vmul.f32 %v102, %v99
      %v117 = vmul.f32 %v102, %v100
      %v118 = vmul.f32 %v102, %v101
      %119 = vst [vmem:[#allocation2] sm:$0xff] %v103
      %120 = vst [vmem:[#allocation2 + $0x8] sm:$0xff] %v104
      %121 = vst [vmem:[#allocation2 + $0x10] sm:$0xff] %v105
      %122 = vst [vmem:[#allocation2 + $0x18] sm:$0xff] %v106
      %123 = vst [vmem:[#allocation2 + $0x20] sm:$0xff] %v107
      %124 = vst [vmem:[#allocation2 + $0x28] sm:$0xff] %v108
      %125 = vst [vmem:[#allocation2 + $0x30] sm:$0xff] %v109
      %126 = vst [vmem:[#allocation2 + $0x38] sm:$0xff] %v110
      %127 = vst [vmem:[#allocation2 + $0x40] sm:$0xff] %v111
      %128 = vst [vmem:[#allocation2 + $0x48] sm:$0xff] %v112
      %129 = vst [vmem:[#allocation2 + $0x50] sm:$0xff] %v113
      %130 = vst [vmem:[#allocation2 + $0x58] sm:$0xff] %v114
      %131 = vst [vmem:[#allocation2 + $0x60] sm:$0xff] %v115
      %132 = vst [vmem:[#allocation2 + $0x68] sm:$0xff] %v116
      %133 = vst [vmem:[#allocation2 + $0x70] sm:$0xff] %v117
      %134 = vst [vmem:[#allocation2 + $0x78] sm:$0xff] %v118
    $region45: #{tpu_custom_call.1} parent=1 // pred_fallthru
      _
    %v135 = vld [vmem:[#allocation2] sm:$0xff]
    %v136 = vld [vmem:[#allocation2 + $0x8] sm:$0xff]
    %v137 = vld [vmem:[#allocation2 + $0x10] sm:$0xff]
    %v138 = vld [vmem:[#allocation2 + $0x18] sm:$0xff]
    %v139 = vld [vmem:[#allocation2 + $0x20] sm:$0xff]
    %v140 = vld [vmem:[#allocation2 + $0x28] sm:$0xff]
    %v141 = vld [vmem:[#allocation2 + $0x30] sm:$0xff]
    %v142 = vld [vmem:[#allocation2 + $0x38] sm:$0xff]
    %v143 = vld [vmem:[#allocation2 + $0x40] sm:$0xff]
    %v144 = vld [vmem:[#allocation2 + $0x48] sm:$0xff]
    %v145 = vld [vmem:[#allocation2 + $0x50] sm:$0xff]
    %v146 = vld [vmem:[#allocation2 + $0x58] sm:$0xff]
    %v147 = vld [vmem:[#allocation2 + $0x60] sm:$0xff]
    %v148 = vld [vmem:[#allocation2 + $0x68] sm:$0xff]
    %v149 = vld [vmem:[#allocation2 + $0x70] sm:$0xff]
    %v150 = vld [vmem:[#allocation2 + $0x78] sm:$0xff]
    %v151 = vld [vmem:[#allocation7] sm:$0xf]
    %v152 = vld [vmem:[#allocation7 + $0x4] sm:$0xf]
    %v153 = vld [vmem:[#allocation7 + $0x8] sm:$0xf]
    %v154 = vld [vmem:[#allocation7 + $0xc] sm:$0xf]
    %v155 = vld [vmem:[#allocation7 + $0x10] sm:$0xf]
    %v156 = vld [vmem:[#allocation7 + $0x14] sm:$0xf]
    %v157 = vld [vmem:[#allocation7 + $0x18] sm:$0xf]
    %v158 = vld [vmem:[#allocation7 + $0x1c] sm:$0xf]
    %v159 = vld [vmem:[#allocation7 + $0x20] sm:$0xf]
    %v160 = vld [vmem:[#allocation7 + $0x24] sm:$0xf]
    %v161 = vld [vmem:[#allocation7 + $0x28] sm:$0xf]
    %v162 = vld [vmem:[#allocation7 + $0x2c] sm:$0xf]
    %v163 = vld [vmem:[#allocation7 + $0x30] sm:$0xf]
    %v164 = vld [vmem:[#allocation7 + $0x34] sm:$0xf]
    %v165 = vld [vmem:[#allocation7 + $0x38] sm:$0xf]
    %v166 = vld [vmem:[#allocation7 + $0x3c] sm:$0xf]
    %v167 = vunpack.c.l.bf16 %v151
    %v168 = vunpack.c.l.bf16 %v152
    %v169 = vunpack.c.l.bf16 %v153
    %v170 = vunpack.c.l.bf16 %v154
    %v171 = vunpack.c.l.bf16 %v155
    %v172 = vunpack.c.l.bf16 %v156
    %v173 = vunpack.c.l.bf16 %v157
    %v174 = vunpack.c.l.bf16 %v158
    %v175 = vunpack.c.l.bf16 %v159
    %v176 = vunpack.c.l.bf16 %v160
    %v177 = vunpack.c.l.bf16 %v161
    %v178 = vunpack.c.l.bf16 %v162
    %v179 = vunpack.c.l.bf16 %v163
    %v180 = vunpack.c.l.bf16 %v164
    %v181 = vunpack.c.l.bf16 %v165
    %v182 = vunpack.c.l.bf16 %v166
    %v183 = vld [vmem:[#allocation9] sm:$0xff]
    %v184 = vld [vmem:[#allocation9 + $0x8] sm:$0xff]
    %v185 = vld [vmem:[#allocation9 + $0x10] sm:$0xff]
    %v186 = vld [vmem:[#allocation9 + $0x18] sm:$0xff]
    %v187 = vld [vmem:[#allocation9 + $0x20] sm:$0xff]
    %v188 = vld [vmem:[#allocation9 + $0x28] sm:$0xff]
    %v189 = vld [vmem:[#allocation9 + $0x30] sm:$0xff]
    %v190 = vld [vmem:[#allocation9 + $0x38] sm:$0xff]
    %v191 = vld [vmem:[#allocation9 + $0x40] sm:$0xff]
    %v192 = vld [vmem:[#allocation9 + $0x48] sm:$0xff]
    %v193 = vld [vmem:[#allocation9 + $0x50] sm:$0xff]
    %v194 = vld [vmem:[#allocation9 + $0x58] sm:$0xff]
    %v195 = vld [vmem:[#allocation9 + $0x60] sm:$0xff]
    %v196 = vld [vmem:[#allocation9 + $0x68] sm:$0xff]
    %v197 = vld [vmem:[#allocation9 + $0x70] sm:$0xff]
    %v198 = vld [vmem:[#allocation9 + $0x78] sm:$0xff]
    %199 = vmatprep.subr.mxu0 0.0
    %200 = vmatpush1.msra.mxu0 %v183
    %201 = vmatprep.subr.mxu0 0.0
    %202 = vmatpush1.msra.mxu0 %v184
    %203 = vmatprep.subr.mxu0 0.0
    %204 = vmatpush1.msra.mxu0 %v185
    %205 = vmatprep.subr.mxu0 0.0
    %206 = vmatpush1.msra.mxu0 %v186
    %207 = vmatprep.subr.mxu0 0.0
    %208 = vmatpush1.msra.mxu0 %v187
    %209 = vmatprep.subr.mxu0 0.0
    %210 = vmatpush1.msra.mxu0 %v188
    %211 = vmatprep.subr.mxu0 0.0
    %212 = vmatpush1.msra.mxu0 %v189
    %213 = vmatprep.subr.mxu0 0.0
    %214 = vmatpush1.msra.mxu0 %v190
    %215 = vmatprep.subr.mxu0 0.0
    %216 = vmatpush1.msra.mxu0 %v191
    %217 = vmatprep.subr.mxu0 0.0
    %218 = vmatpush1.msra.mxu0 %v192
    %219 = vmatprep.subr.mxu0 0.0
    %220 = vmatpush1.msra.mxu0 %v193
    %221 = vmatprep.subr.mxu0 0.0
    %222 = vmatpush1.msra.mxu0 %v194
    %223 = vmatprep.subr.mxu0 0.0
    %224 = vmatpush1.msra.mxu0 %v195
    %225 = vmatprep.subr.mxu0 0.0
    %226 = vmatpush1.msra.mxu0 %v196
    %227 = vmatprep.subr.mxu0 0.0
    %228 = vmatpush1.msra.mxu0 %v197
    %229 = vmatprep.subr.mxu0 0.0
    %230 = vmatpush1.msra.mxu0 %v198
    %231 = vmatprep.subr.mxu0 0.0
    %232 = vmatpush1.msra.mxu0 0.0
    %233 = vmatprep.subr.mxu0 0.0
    %234 = vmatpush1.msra.mxu0 0.0
    %235 = vmatprep.subr.mxu0 0.0
    %236 = vmatpush1.msra.mxu0 0.0
    %237 = vmatprep.subr.mxu0 0.0
    %238 = vmatpush1.msra.mxu0 0.0
    %239 = vmatprep.subr.mxu0 0.0
    %240 = vmatpush1.msra.mxu0 0.0
    %241 = vmatprep.subr.mxu0 0.0
    %242 = vmatpush1.msra.mxu0 0.0
    %243 = vmatprep.subr.mxu0 0.0
    %244 = vmatpush1.msra.mxu0 0.0
    %245 = vmatprep.subr.mxu0 0.0
    %246 = vmatpush1.msra.mxu0 0.0
    %247 = vmatprep.subr.mxu0 0.0
    %248 = vmatpush1.msra.mxu0 0.0
    %249 = vmatprep.subr.mxu0 0.0
    %250 = vmatpush1.msra.mxu0 0.0
    %251 = vmatprep.subr.mxu0 0.0
    %252 = vmatpush1.msra.mxu0 0.0
    %253 = vmatprep.subr.mxu0 0.0
    %254 = vmatpush1.msra.mxu0 0.0
    %255 = vmatprep.subr.mxu0 0.0
    %256 = vmatpush1.msra.mxu0 0.0
    %257 = vmatprep.subr.mxu0 0.0
    %258 = vmatpush1.msra.mxu0 0.0
    %259 = vmatprep.subr.mxu0 0.0
    %260 = vmatpush1.msra.mxu0 0.0
    %261 = vmatprep.subr.mxu0 0.0
    %262 = vmatpush1.msra.mxu0 0.0
    %263 = vmatprep.mubr.f32.mxu0 0.0
    %264 = vmatmul.mubr.f32.gmra.mrb[0].mxu0 %v167
    %v265 = vpop.f32.mrb[0].mxu0
    %v266 = vadd.f32 0.0, %v265
    %v267 = vpop.f32.mrb[0].mxu0
    %268 = vmatprep.mubr.f32.mxu0 0.0
    %269 = vmatmul.mubr.f32.gmra.mrb[0].mxu0 %v168
    %v270 = vpop.f32.mrb[0].mxu0
    %v271 = vadd.f32 0.0, %v270
    %v272 = vpop.f32.mrb[0].mxu0
    %273 = vmatprep.mubr.f32.mxu0 0.0
    %274 = vmatmul.mubr.f32.gmra.mrb[0].mxu0 %v169
    %v275 = vpop.f32.mrb[0].mxu0
    %v276 = vadd.f32 0.0, %v275
    %v277 = vpop.f32.mrb[0].mxu0
    %278 = vmatprep.mubr.f32.mxu0 0.0
    %279 = vmatmul.mubr.f32.gmra.mrb[0].mxu0 %v170
    %v280 = vpop.f32.mrb[0].mxu0
    %v281 = vadd.f32 0.0, %v280
    %v282 = vpop.f32.mrb[0].mxu0
    %283 = vmatprep.mubr.f32.mxu0 0.0
    %284 = vmatmul.mubr.f32.gmra.mrb[0].mxu0 %v171
    %v285 = vpop.f32.mrb[0].mxu0
    %v286 = vadd.f32 0.0, %v285
    %v287 = vpop.f32.mrb[0].mxu0
    %288 = vmatprep.mubr.f32.mxu0 0.0
    %289 = vmatmul.mubr.f32.gmra.mrb[0].mxu0 %v172
    %v290 = vpop.f32.mrb[0].mxu0
    %v291 = vadd.f32 0.0, %v290
    %v292 = vpop.f32.mrb[0].mxu0
    %293 = vmatprep.mubr.f32.mxu0 0.0
    %294 = vmatmul.mubr.f32.gmra.mrb[0].mxu0 %v173
    %v295 = vpop.f32.mrb[0].mxu0
    %v296 = vadd.f32 0.0, %v295
    %v297 = vpop.f32.mrb[0].mxu0
    %298 = vmatprep.mubr.f32.mxu0 0.0
    %299 = vmatmul.mubr.f32.gmra.mrb[0].mxu0 %v174
    %v300 = vpop.f32.mrb[0].mxu0
    %v301 = vadd.f32 0.0, %v300
    %v302 = vpop.f32.mrb[0].mxu0
    %303 = vmatprep.mubr.f32.mxu0 0.0
    %304 = vmatmul.mubr.f32.gmra.mrb[0].mxu0 %v175
    %v305 = vpop.f32.mrb[0].mxu0
    %v306 = vadd.f32 0.0, %v305
    %v307 = vpop.f32.mrb[0].mxu0
    %308 = vmatprep.mubr.f32.mxu0 0.0
    %309 = vmatmul.mubr.f32.gmra.mrb[0].mxu0 %v176
    %v310 = vpop.f32.mrb[0].mxu0
    %v311 = vadd.f32 0.0, %v310
    %v312 = vpop.f32.mrb[0].mxu0
    %313 = vmatprep.mubr.f32.mxu0 0.0
    %314 = vmatmul.mubr.f32.gmra.mrb[0].mxu0 %v177
    %v315 = vpop.f32.mrb[0].mxu0
    %v316 = vadd.f32 0.0, %v315
    %v317 = vpop.f32.mrb[0].mxu0
    %318 = vmatprep.mubr.f32.mxu0 0.0
    %319 = vmatmul.mubr.f32.gmra.mrb[0].mxu0 %v178
    %v320 = vpop.f32.mrb[0].mxu0
    %v321 = vadd.f32 0.0, %v320
    %v322 = vpop.f32.mrb[0].mxu0
    %323 = vmatprep.mubr.f32.mxu0 0.0
    %324 = vmatmul.mubr.f32.gmra.mrb[0].mxu0 %v179
    %v325 = vpop.f32.mrb[0].mxu0
    %v326 = vadd.f32 0.0, %v325
    %v327 = vpop.f32.mrb[0].mxu0
    %328 = vmatprep.mubr.f32.mxu0 0.0
    %329 = vmatmul.mubr.f32.gmra.mrb[0].mxu0 %v180
    %v330 = vpop.f32.mrb[0].mxu0
    %v331 = vadd.f32 0.0, %v330
    %v332 = vpop.f32.mrb[0].mxu0
    %333 = vmatprep.mubr.f32.mxu0 0.0
    %334 = vmatmul.mubr.f32.gmra.mrb[0].mxu0 %v181
    %v335 = vpop.f32.mrb[0].mxu0
    %v336 = vadd.f32 0.0, %v335
    %v337 = vpop.f32.mrb[0].mxu0
    %338 = vmatprep.mubr.f32.mxu0 0.0
    %339 = vmatmul.mubr.f32.gmra.mrb[0].mxu0 %v182
    %v340 = vpop.f32.mrb[0].mxu0
    %v341 = vadd.f32 0.0, %v340
    %v342 = vpop.f32.mrb[0].mxu0
    %343 = vdwg.mxu0
    %v344 = vadd.f32 %v135, %v266
    %v345 = vadd.f32 %v136, %v271
    %v346 = vadd.f32 %v137, %v276
    %v347 = vadd.f32 %v138, %v281
    %v348 = vadd.f32 %v139, %v286
    %v349 = vadd.f32 %v140, %v291
    %v350 = vadd.f32 %v141, %v296
    %v351 = vadd.f32 %v142, %v301
    %v352 = vadd.f32 %v143, %v306
    %v353 = vadd.f32 %v144, %v311
    %v354 = vadd.f32 %v145, %v316
    %v355 = vadd.f32 %v146, %v321
    %v356 = vadd.f32 %v147, %v326
    %v357 = vadd.f32 %v148, %v331
    %v358 = vadd.f32 %v149, %v336
    %v359 = vadd.f32 %v150, %v341
    %360 = vst [vmem:[#allocation2] sm:$0xff] %v344
    %361 = vst [vmem:[#allocation2 + $0x8] sm:$0xff] %v345
    %362 = vst [vmem:[#allocation2 + $0x10] sm:$0xff] %v346
    %363 = vst [vmem:[#allocation2 + $0x18] sm:$0xff] %v347
    %364 = vst [vmem:[#allocation2 + $0x20] sm:$0xff] %v348
    %365 = vst [vmem:[#allocation2 + $0x28] sm:$0xff] %v349
    %366 = vst [vmem:[#allocation2 + $0x30] sm:$0xff] %v350
    %367 = vst [vmem:[#allocation2 + $0x38] sm:$0xff] %v351
    %368 = vst [vmem:[#allocation2 + $0x40] sm:$0xff] %v352
    %369 = vst [vmem:[#allocation2 + $0x48] sm:$0xff] %v353
    %370 = vst [vmem:[#allocation2 + $0x50] sm:$0xff] %v354
    %371 = vst [vmem:[#allocation2 + $0x58] sm:$0xff] %v355
    %372 = vst [vmem:[#allocation2 + $0x60] sm:$0xff] %v356
    %373 = vst [vmem:[#allocation2 + $0x68] sm:$0xff] %v357
    %374 = vst [vmem:[#allocation2 + $0x70] sm:$0xff] %v358
    %375 = vst [vmem:[#allocation2 + $0x78] sm:$0xff] %v359
    // Predicated region
    $region46: #{tpu_custom_call.1} parent=1 // pred_check
      %p376 = pneg %p80
    $region47: #{tpu_custom_call.1} parent=1 // pred_check_branch
      %378 = sbr.rel (%p376) target = $region49
    $region48: #{tpu_custom_call.1} parent=1 // pred_region
      %v379 = vld [vmem:[#allocation2] sm:$0xff]
      %v380 = vld [vmem:[#allocation2 + $0x8] sm:$0xff]
      %v381 = vld [vmem:[#allocation2 + $0x10] sm:$0xff]
      %v382 = vld [vmem:[#allocation2 + $0x18] sm:$0xff]
      %v383 = vld [vmem:[#allocation2 + $0x20] sm:$0xff]
      %v384 = vld [vmem:[#allocation2 + $0x28] sm:$0xff]
      %v385 = vld [vmem:[#allocation2 + $0x30] sm:$0xff]
      %v386 = vld [vmem:[#allocation2 + $0x38] sm:$0xff]
      %v387 = vld [vmem:[#allocation2 + $0x40] sm:$0xff]
      %v388 = vld [vmem:[#allocation2 + $0x48] sm:$0xff]
      %v389 = vld [vmem:[#allocation2 + $0x50] sm:$0xff]
      %v390 = vld [vmem:[#allocation2 + $0x58] sm:$0xff]
      %v391 = vld [vmem:[#allocation2 + $0x60] sm:$0xff]
      %v392 = vld [vmem:[#allocation2 + $0x68] sm:$0xff]
      %v393 = vld [vmem:[#allocation2 + $0x70] sm:$0xff]
      %v394 = vld [vmem:[#allocation2 + $0x78] sm:$0xff]
      %v395 = vld [vmem:[#allocation10] sm:$0xff]
      %v396 = vld [vmem:[#allocation10 + $0x8] sm:$0xff]
      %v397 = vld [vmem:[#allocation10 + $0x10] sm:$0xff]
      %v398 = vld [vmem:[#allocation10 + $0x18] sm:$0xff]
      %v399 = vld [vmem:[#allocation10 + $0x20] sm:$0xff]
      %v400 = vld [vmem:[#allocation10 + $0x28] sm:$0xff]
      %v401 = vld [vmem:[#allocation10 + $0x30] sm:$0xff]
      %v402 = vld [vmem:[#allocation10 + $0x38] sm:$0xff]
      %v403 = vld [vmem:[#allocation10 + $0x40] sm:$0xff]
      %v404 = vld [vmem:[#allocation10 + $0x48] sm:$0xff]
      %v405 = vld [vmem:[#allocation10 + $0x50] sm:$0xff]
      %v406 = vld [vmem:[#allocation10 + $0x58] sm:$0xff]
      %v407 = vld [vmem:[#allocation10 + $0x60] sm:$0xff]
      %v408 = vld [vmem:[#allocation10 + $0x68] sm:$0xff]
      %v409 = vld [vmem:[#allocation10 + $0x70] sm:$0xff]
      %v410 = vld [vmem:[#allocation10 + $0x78] sm:$0xff]
      %v411 = vld [vmem:[%s5] sm:$0x1]
      %v413 = vlaneseq
      %v414 = vshrl.u32 %v413, 7
      %v415 = vsub.s32 0, %v414
      %v416 = vrot.slane %v411, %v415
      %418 = vmatprep.subr.mxu0 0.0
      %419 = vmatpush1.msra.mxu0 %v395
      %420 = vmatprep.subr.mxu0 0.0
      %421 = vmatpush1.msra.mxu0 %v396
      %422 = vmatprep.subr.mxu0 0.0
      %423 = vmatpush1.msra.mxu0 %v397
      %424 = vmatprep.subr.mxu0 0.0
      %425 = vmatpush1.msra.mxu0 %v398
      %426 = vmatprep.subr.mxu0 0.0
      %427 = vmatpush1.msra.mxu0 %v399
      %428 = vmatprep.subr.mxu0 0.0
      %429 = vmatpush1.msra.mxu0 %v400
      %430 = vmatprep.subr.mxu0 0.0
      %431 = vmatpush1.msra.mxu0 %v401
      %432 = vmatprep.subr.mxu0 0.0
      %433 = vmatpush1.msra.mxu0 %v402
      %434 = vmatprep.subr.mxu0 0.0
      %435 = vmatpush1.msra.mxu0 %v403
      %436 = vmatprep.subr.mxu0 0.0
      %437 = vmatpush1.msra.mxu0 %v404
      %438 = vmatprep.subr.mxu0 0.0
      %439 = vmatpush1.msra.mxu0 %v405
      %440 = vmatprep.subr.mxu0 0.0
      %441 = vmatpush1.msra.mxu0 %v406
      %442 = vmatprep.subr.mxu0 0.0
      %443 = vmatpush1.msra.mxu0 %v407
      %444 = vmatprep.subr.mxu0 0.0
      %445 = vmatpush1.msra.mxu0 %v408
      %446 = vmatprep.subr.mxu0 0.0
      %447 = vmatpush1.msra.mxu0 %v409
      %448 = vmatprep.subr.mxu0 0.0
      %449 = vmatpush1.msra.mxu0 %v410
      %450 = vmatprep.subr.mxu0 0.0
      %451 = vmatpush1.msra.mxu0 0.0
      %452 = vmatprep.subr.mxu0 0.0
      %453 = vmatpush1.msra.mxu0 0.0
      %454 = vmatprep.subr.mxu0 0.0
      %455 = vmatpush1.msra.mxu0 0.0
      %456 = vmatprep.subr.mxu0 0.0
      %457 = vmatpush1.msra.mxu0 0.0
      %458 = vmatprep.subr.mxu0 0.0
      %459 = vmatpush1.msra.mxu0 0.0
      %460 = vmatprep.subr.mxu0 0.0
      %461 = vmatpush1.msra.mxu0 0.0
      %462 = vmatprep.subr.mxu0 0.0
      %463 = vmatpush1.msra.mxu0 0.0
      %464 = vmatprep.subr.mxu0 0.0
      %465 = vmatpush1.msra.mxu0 0.0
      %466 = vmatprep.subr.mxu0 0.0
      %467 = vmatpush1.msra.mxu0 0.0
      %468 = vmatprep.subr.mxu0 0.0
      %469 = vmatpush1.msra.mxu0 0.0
      %470 = vmatprep.subr.mxu0 0.0
      %471 = vmatpush1.msra.mxu0 0.0
      %472 = vmatprep.subr.mxu0 0.0
      %473 = vmatpush1.msra.mxu0 0.0
      %474 = vmatprep.subr.mxu0 0.0
      %475 = vmatpush1.msra.mxu0 0.0
      %476 = vmatprep.subr.mxu0 0.0
      %477 = vmatpush1.msra.mxu0 0.0
      %478 = vmatprep.subr.mxu0 0.0
      %479 = vmatpush1.msra.mxu0 0.0
      %480 = vmatprep.subr.mxu0 0.0
      %481 = vmatpush1.msra.mxu0 0.0
      %482 = vmatprep.mubr.f32.mxu0 0.0
      %483 = vmatmul.mubr.f32.gmra.mrb[0].mxu0 %v379
      %v484 = vpop.f32.mrb[0].mxu0
      %v485 = vadd.f32 %v416, %v484
      %v486 = vpop.f32.mrb[0].mxu0
      %487 = vmatprep.mubr.f32.mxu0 0.0
      %488 = vmatmul.mubr.f32.gmra.mrb[0].mxu0 %v380
      %v489 = vpop.f32.mrb[0].mxu0
      %v490 = vadd.f32 %v416, %v489
      %v491 = vpop.f32.mrb[0].mxu0
      %492 = vmatprep.mubr.f32.mxu0 0.0
      %493 = vmatmul.mubr.f32.gmra.mrb[0].mxu0 %v381
      %v494 = vpop.f32.mrb[0].mxu0
      %v495 = vadd.f32 %v416, %v494
      %v496 = vpop.f32.mrb[0].mxu0
      %497 = vmatprep.mubr.f32.mxu0 0.0
      %498 = vmatmul.mubr.f32.gmra.mrb[0].mxu0 %v382
      %v499 = vpop.f32.mrb[0].mxu0
      %v500 = vadd.f32 %v416, %v499
      %v501 = vpop.f32.mrb[0].mxu0
      %502 = vmatprep.mubr.f32.mxu0 0.0
      %503 = vmatmul.mubr.f32.gmra.mrb[0].mxu0 %v383
      %v504 = vpop.f32.mrb[0].mxu0
      %v505 = vadd.f32 %v416, %v504
      %v506 = vpop.f32.mrb[0].mxu0
      %507 = vmatprep.mubr.f32.mxu0 0.0
      %508 = vmatmul.mubr.f32.gmra.mrb[0].mxu0 %v384
      %v509 = vpop.f32.mrb[0].mxu0
      %v510 = vadd.f32 %v416, %v509
      %v511 = vpop.f32.mrb[0].mxu0
      %512 = vmatprep.mubr.f32.mxu0 0.0
      %513 = vmatmul.mubr.f32.gmra.mrb[0].mxu0 %v385
      %v514 = vpop.f32.mrb[0].mxu0
      %v515 = vadd.f32 %v416, %v514
      %v516 = vpop.f32.mrb[0].mxu0
      %517 = vmatprep.mubr.f32.mxu0 0.0
      %518 = vmatmul.mubr.f32.gmra.mrb[0].mxu0 %v386
      %v519 = vpop.f32.mrb[0].mxu0
      %v520 = vadd.f32 %v416, %v519
      %v521 = vpop.f32.mrb[0].mxu0
      %522 = vmatprep.mubr.f32.mxu0 0.0
      %523 = vmatmul.mubr.f32.gmra.mrb[0].mxu0 %v387
      %v524 = vpop.f32.mrb[0].mxu0
      %v525 = vadd.f32 %v416, %v524
      %v526 = vpop.f32.mrb[0].mxu0
      %527 = vmatprep.mubr.f32.mxu0 0.0
      %528 = vmatmul.mubr.f32.gmra.mrb[0].mxu0 %v388
      %v529 = vpop.f32.mrb[0].mxu0
      %v530 = vadd.f32 %v416, %v529
      %v531 = vpop.f32.mrb[0].mxu0
      %532 = vmatprep.mubr.f32.mxu0 0.0
      %533 = vmatmul.mubr.f32.gmra.mrb[0].mxu0 %v389
      %v534 = vpop.f32.mrb[0].mxu0
      %v535 = vadd.f32 %v416, %v534
      %v536 = vpop.f32.mrb[0].mxu0
      %537 = vmatprep.mubr.f32.mxu0 0.0
      %538 = vmatmul.mubr.f32.gmra.mrb[0].mxu0 %v390
      %v539 = vpop.f32.mrb[0].mxu0
      %v540 = vadd.f32 %v416, %v539
      %v541 = vpop.f32.mrb[0].mxu0
      %542 = vmatprep.mubr.f32.mxu0 0.0
      %543 = vmatmul.mubr.f32.gmra.mrb[0].mxu0 %v391
      %v544 = vpop.f32.mrb[0].mxu0
      %v545 = vadd.f32 %v416, %v544
      %v546 = vpop.f32.mrb[0].mxu0
      %547 = vmatprep.mubr.f32.mxu0 0.0
      %548 = vmatmul.mubr.f32.gmra.mrb[0].mxu0 %v392
      %v549 = vpop.f32.mrb[0].mxu0
      %v550 = vadd.f32 %v416, %v549
      %v551 = vpop.f32.mrb[0].mxu0
      %552 = vmatprep.mubr.f32.mxu0 0.0
      %553 = vmatmul.mubr.f32.gmra.mrb[0].mxu0 %v393
      %v554 = vpop.f32.mrb[0].mxu0
      %v555 = vadd.f32 %v416, %v554
      %v556 = vpop.f32.mrb[0].mxu0
      %557 = vmatprep.mubr.f32.mxu0 0.0
      %558 = vmatmul.mubr.f32.gmra.mrb[0].mxu0 %v394
      %v559 = vpop.f32.mrb[0].mxu0
      %v560 = vadd.f32 %v416, %v559
      %v561 = vpop.f32.mrb[0].mxu0
      %562 = vdwg.mxu0
      %563 = vst [vmem:[#allocation12] sm:$0xff] %v485
      %564 = vst [vmem:[#allocation12 + $0x8] sm:$0xff] %v490
      %565 = vst [vmem:[#allocation12 + $0x10] sm:$0xff] %v495
      %566 = vst [vmem:[#allocation12 + $0x18] sm:$0xff] %v500
      %567 = vst [vmem:[#allocation12 + $0x20] sm:$0xff] %v505
      %568 = vst [vmem:[#allocation12 + $0x28] sm:$0xff] %v510
      %569 = vst [vmem:[#allocation12 + $0x30] sm:$0xff] %v515
      %570 = vst [vmem:[#allocation12 + $0x38] sm:$0xff] %v520
      %571 = vst [vmem:[#allocation12 + $0x40] sm:$0xff] %v525
      %572 = vst [vmem:[#allocation12 + $0x48] sm:$0xff] %v530
      %573 = vst [vmem:[#allocation12 + $0x50] sm:$0xff] %v535
      %574 = vst [vmem:[#allocation12 + $0x58] sm:$0xff] %v540
      %575 = vst [vmem:[#allocation12 + $0x60] sm:$0xff] %v545
      %576 = vst [vmem:[#allocation12 + $0x68] sm:$0xff] %v550
      %577 = vst [vmem:[#allocation12 + $0x70] sm:$0xff] %v555
      %578 = vst [vmem:[#allocation12 + $0x78] sm:$0xff] %v560
    $region49: #{tpu_custom_call.1} parent=1 // pred_fallthru
      _
    // Predicated region
    $region50: #{tpu_custom_call.1} parent=1 // pred_check
      _
    $region51: #{tpu_custom_call.1} parent=1 // pred_check_branch
      %580 = sbr.rel (0) target = $region53
    $region52: #{tpu_custom_call.1} parent=1 // pred_region
      %s582 = ssub.s32 2048, 2048
      %583 = vsyncadd [#allocation6], %s582
      %s584 = sshll.u32 [#allocation12], 4
      %s585 = int_to_ptr.vmem [resolvable:$true] %s584
      %590 = dma.vmem_to_hbm [thread:$0]  %s585, 2048, %s6, [#allocation6], 128, 128, 8
    $region53: #{tpu_custom_call.1} parent=1 // pred_fallthru
      _
    // Predicated region
    $region54: #{tpu_custom_call.1} parent=1 // pred_check
      _
    $region55: #{tpu_custom_call.1} parent=1 // pred_check_branch
      %592 = sbr.rel (0) target = $region57
    $region56: #{tpu_custom_call.1} parent=1 // pred_region
      %593 = dma.done [#allocation6], 2048
    $region57: #{tpu_custom_call.1} parent=1 // pred_fallthru
      _
    %594 = vsyncpa [#allocation5], 1
    %595 = vsyncpa [#allocation8], 1
    %596 = vsyncpa [#allocation11], 1
    %597 = vsyncpa [#allocation6], 1

</llo_original>
